<compile_context>
chip_gen: v7x
topology: tpu7x:2x2x1
jax: 0.10.0
libtpu: 0.0.40
codegen_flags: <defaults>
</compile_context>

<pallas_src>
import functools

import jax
import jax.numpy as jnp
from jax.experimental import pallas as pl
from jax.experimental.pallas import tpu as pltpu


_LANES = 1024        # lane-dense trailing dim (multiple of 128)
_BLOCK_ROWS = 512    # rows per grid step for large inputs -> 2 MiB f32 tile


def _noise_kernel_tpu(seed_ref, x_ref, o_ref, *, mean, std):
    # Independent PRNG stream per grid step (avoids replaying identical noise
    # in every tile).
    pltpu.prng_seed(seed_ref[0], pl.program_id(0))

    rows, lanes = x_ref.shape
    half = lanes // 2

    def uniform01(shape):
        # Raw 32-bit random words -> uniform float32 in [0, 1).
        bits = pltpu.bitcast(pltpu.prng_random_bits(shape), jnp.uint32)
        # 23 random mantissa bits under exponent 127 -> [1, 2); subtract 1.
        mant = (bits >> jnp.uint32(9)) | jnp.uint32(0x3F800000)
        return pltpu.bitcast(mant, jnp.float32) - jnp.float32(1.0)

    # Box-Muller using BOTH branches: each (rng draw, log, sqrt) pair yields
    # two standard normals (cos -> low half of lanes, sin -> high half).
    u1 = jnp.float32(1.0) - uniform01((rows, half))   # (0, 1], log-safe
    u2 = uniform01((rows, half))                      # [0, 1)
    r = jnp.sqrt(jnp.float32(-2.0) * jnp.log(u1))
    theta = jnp.float32(2.0 * jnp.pi) * u2
    z_lo = r * jnp.cos(theta)
    z_hi = r * jnp.sin(theta)

    std_f = jnp.float32(std)
    mean_f = jnp.float32(mean)
    x_lo = x_ref[:, :half].astype(jnp.float32)
    x_hi = x_ref[:, half:].astype(jnp.float32)
    o_ref[:, :half] = (x_lo + z_lo * std_f + mean_f).astype(o_ref.dtype)
    o_ref[:, half:] = (x_hi + z_hi * std_f + mean_f).astype(o_ref.dtype)


def _noise_kernel_fallback(x_ref, z_ref, o_ref, *, mean, std):
    # Non-TPU path: noise precomputed outside, fused scale/shift/add here.
    x = x_ref[...].astype(jnp.float32)
    z = z_ref[...]
    o_ref[...] = (x + z * jnp.float32(std) + jnp.float32(mean)).astype(o_ref.dtype)


def _plan_rows(n):
    """Pick (padded_rows, block_rows) for a lane-dense (rows, _LANES) slab."""
    rows = pl.cdiv(n, _LANES)
    if rows <= _BLOCK_ROWS:
        padded_rows = max(8, ((rows + 7) // 8) * 8)   # sublane granularity
        return padded_rows, padded_rows                # single block
    padded_rows = pl.cdiv(rows, _BLOCK_ROWS) * _BLOCK_ROWS
    return padded_rows, _BLOCK_ROWS


def add_gaussian_noise(x, seed, mean=0.0, std=1.0):
    """Pallas equivalent of AddGaussianNoise(mean, std).forward(x)."""
    orig_shape = x.shape
    dtype = x.dtype

    n = x.size
    padded_rows, block_rows = _plan_rows(n)
    padded = padded_rows * _LANES

    flat = x.reshape(-1)
    if padded != n:
        flat = jnp.pad(flat, (0, padded - n))
    x2 = flat.reshape(padded_rows, _LANES)            # lane-dense slab
    num_blocks = padded_rows // block_rows

    tile = pl.BlockSpec((block_rows, _LANES), lambda i, *_: (i, 0))
    out_shape = jax.ShapeDtypeStruct(x2.shape, dtype)

    # NOTE: mean/std are baked in as compile-time constants; if they vary at
    # runtime, pass them as extra SMEM scalars instead to avoid recompiles.
    if jax.default_backend() == "tpu":
        kernel = functools.partial(_noise_kernel_tpu,
                                   mean=float(mean), std=float(std))
        seed_arr = jnp.asarray([seed], dtype=jnp.int32)
        out2 = pl.pallas_call(
            kernel,
            out_shape=out_shape,
            grid_spec=pltpu.PrefetchScalarGridSpec(
                num_scalar_prefetch=1,                # seed lands in SMEM
                grid=(num_blocks,),
                in_specs=[tile],
                out_specs=tile,
            ),
            compiler_params=pltpu.CompilerParams(
                dimension_semantics=("parallel",),
                vmem_limit_bytes=32 * 1024 * 1024,
            ),
        )(seed_arr, x2)
    else:
        # TODO(synk): TPU hardware PRNG (prng_seed / prng_random_bits) has no
        # lowering off-TPU; draw the noise with jax.random and fuse the rest.
        kernel = functools.partial(_noise_kernel_fallback,
                                   mean=float(mean), std=float(std))
        z = jax.random.normal(jax.random.PRNGKey(int(seed)), x2.shape,
                              dtype=jnp.float32)
        out2 = pl.pallas_call(
            kernel,
            out_shape=out_shape,
            grid=(num_blocks,),
            in_specs=[tile, tile],
            out_specs=tile,
        )(x2, z)

    return out2.reshape(-1)[:n].reshape(orig_shape)


if __name__ == "__main__":
    key = jax.random.PRNGKey(0)
    # Small NCHW input consistent with an image-augmentation module.
    x = jax.random.normal(key, (2, 4, 16, 16), dtype=jnp.float32)

    mean, std = 0.5, 2.0
    out = add_gaussian_noise(x, seed=1234, mean=mean, std=std)
    out = jax.block_until_ready(out)

    # Sanity checks: shape/dtype preserved, injected noise ~ N(0, 1).
    assert out.shape == x.shape and out.dtype == x.dtype
    noise = (out - x - mean) / std
    nm = float(jnp.mean(noise))
    ns = float(jnp.std(noise))
    assert abs(nm) < 0.2 and abs(ns - 1.0) < 0.2, (nm, ns)

    print("KERNEL_OK")
</pallas_src>

<mosaic_0001>
module attributes {stable_mosaic.version = 11 : i64} {
  func.func @_noise_kernel_fallback(%arg0: i32, %arg1: memref<8x1024xf32, #tpu.memory_space<vmem>>, %arg2: memref<8x1024xf32, #tpu.memory_space<vmem>>, %arg3: memref<8x1024xf32, #tpu.memory_space<vmem>>) attributes {dimension_semantics = [#tpu.dimension_semantics<arbitrary>], iteration_bounds = array<i64: 1>, scalar_prefetch = 0 : i64, scratch_operands = 0 : i64, tpu.core_type = #tpu.core_type<tc>, window_params = [{transform_indices = @transform_0, window_bounds = array<i64: 8, 1024>}, {transform_indices = @transform_1, window_bounds = array<i64: 8, 1024>}, {transform_indices = @transform_2, window_bounds = array<i64: 8, 1024>}]} {
    %c0 = arith.constant 0 : index
    %c0_0 = arith.constant 0 : index
    %0 = vector.load %arg1[%c0, %c0_0] : memref<8x1024xf32, #tpu.memory_space<vmem>>, vector<8x1024xf32>
    %c0_1 = arith.constant 0 : index
    %c0_2 = arith.constant 0 : index
    %1 = vector.load %arg2[%c0_1, %c0_2] : memref<8x1024xf32, #tpu.memory_space<vmem>>, vector<8x1024xf32>
    %cst = arith.constant 2.000000e+00 : f32
    %2 = vector.broadcast %cst : f32 to vector<8x1024xf32>
    %3 = arith.mulf %1, %2 : vector<8x1024xf32>
    %4 = arith.addf %0, %3 : vector<8x1024xf32>
    %cst_3 = arith.constant 5.000000e-01 : f32
    %5 = vector.broadcast %cst_3 : f32 to vector<8x1024xf32>
    %6 = arith.addf %4, %5 : vector<8x1024xf32>
    %c0_4 = arith.constant 0 : index
    %c0_5 = arith.constant 0 : index
    %7 = vector.load %arg3[%c0_4, %c0_5] : memref<8x1024xf32, #tpu.memory_space<vmem>>, vector<8x1024xf32>
    tpu.vector_store %arg3[%c0_4, %c0_5], %6 {strides = array<i32>} : memref<8x1024xf32, #tpu.memory_space<vmem>>, vector<8x1024xf32>,
    return
  }
  func.func @transform_0(%arg0: i32) -> (i32, i32) {
    %c0_i32 = arith.constant 0 : i32
    %c0_i32_0 = arith.constant 0 : i32
    return %arg0, %c0_i32 : i32, i32
  }
  func.func @transform_1(%arg0: i32) -> (i32, i32) {
    %c0_i32 = arith.constant 0 : i32
    %c0_i32_0 = arith.constant 0 : i32
    return %arg0, %c0_i32 : i32, i32
  }
  func.func @transform_2(%arg0: i32) -> (i32, i32) {
    %c0_i32 = arith.constant 0 : i32
    %c0_i32_0 = arith.constant 0 : i32
    return %arg0, %c0_i32 : i32, i32
  }
}

</mosaic_0001>

<llo_original>
// kernel: tpu_custom_call.1
$region0: #{tpu_custom_call.1}
  #allocation0 [shape = 'u32[]', space=smem, size = 0x4, offset = 0x4, fixed_abs, tag = 'smem constant byte address 0x4 - core index']
  #allocation1 [shape = 'u32[144,128]{1,0:T(1,128)}', space=vmem, size = 0x12000, scoped, tag = 'internal scratch']
  %s0 = inlined_call_operand.hbm [shape: f32[8,1024], index: 0, kind: input, shape index: {}]
  %s1 = inlined_call_operand.hbm [shape: f32[8,1024], index: 1, kind: input, shape index: {}]
  %s2 = inlined_call_operand.hbm [shape: f32[8,1024], index: 2, kind: output, shape index: {}]
  %s3 = sld [smem:[#allocation0]]
  $region26: #{tpu_custom_call.1} parent=0
    _
  %s5 = ssub.s32 1, %s3
  %s6 = scalar_select 0, %s5, %s3
  $region1: #{tpu_custom_call.1} parent=0
    #allocation2 [shape = 'u8[32768]{0}', space=vmem, size = 0x8000, scoped, tag = 'input window, operand 0, single buffered']
    #allocation3 [shape = 's32[1]{0}', space=sflag, size = 0x4, scoped, tag = 'scoped memory for tpu_custom_call.1']
    #allocation4 [shape = 's32[1]{0}', space=sflag, size = 0x4, scoped, tag = 'scoped memory for tpu_custom_call.1']
    #allocation5 [shape = 'u8[32768]{0}', space=vmem, size = 0x8000, scoped, tag = 'input window, operand 1, single buffered']
    #allocation6 [shape = 's32[1]{0}', space=sflag, size = 0x4, scoped, tag = 'scoped memory for tpu_custom_call.1']
    #allocation7 [shape = 'u8[32768]{0}', space=vmem, size = 0x8000, scoped, tag = 'output window, operand 0, single buffered']
    %7 = vsyncpa [#allocation3], 0
    %8 = vsyncpa [#allocation6], 0
    %9 = vsyncpa [#allocation4], 0
    // Predicated region
    $region2: #{tpu_custom_call.1} parent=1 // pred_check
      _
    $region3: #{tpu_custom_call.1} parent=1 // pred_check_branch
      %11 = sbr.rel (0) target = $region5
    $region4: #{tpu_custom_call.1} parent=1 // pred_region
      %s13 = ssub.s32 1024, 1024
      %14 = vsyncadd [#allocation3], %s13
      %s16 = sshll.u32 [#allocation2], 4
      %s17 = int_to_ptr.vmem [resolvable:$true] %s16
      %19 = dma.hbm_to_vmem [thread:$0]  %s0, 1024, %s17, [#allocation3]
    $region5: #{tpu_custom_call.1} parent=1 // pred_fallthru
      _
    // Predicated region
    $region6: #{tpu_custom_call.1} parent=1 // pred_check
      _
    $region7: #{tpu_custom_call.1} parent=1 // pred_check_branch
      %21 = sbr.rel (0) target = $region9
    $region8: #{tpu_custom_call.1} parent=1 // pred_region
      %s23 = ssub.s32 1024, 1024
      %24 = vsyncadd [#allocation6], %s23
      %s26 = sshll.u32 [#allocation5], 4
      %s27 = int_to_ptr.vmem [resolvable:$true] %s26
      %29 = dma.hbm_to_vmem [thread:$0]  %s1, 1024, %s27, [#allocation6]
    $region9: #{tpu_custom_call.1} parent=1 // pred_fallthru
      _
    // Predicated region
    $region10: #{tpu_custom_call.1} parent=1 // pred_check
      _
    $region11: #{tpu_custom_call.1} parent=1 // pred_check_branch
      %31 = sbr.rel (0) target = $region13
    $region12: #{tpu_custom_call.1} parent=1 // pred_region
      %32 = dma.done [#allocation3], 1024
    $region13: #{tpu_custom_call.1} parent=1 // pred_fallthru
      _
    // Predicated region
    $region14: #{tpu_custom_call.1} parent=1 // pred_check
      _
    $region15: #{tpu_custom_call.1} parent=1 // pred_check_branch
      %34 = sbr.rel (0) target = $region17
    $region16: #{tpu_custom_call.1} parent=1 // pred_region
      %35 = dma.done [#allocation6], 1024
    $region17: #{tpu_custom_call.1} parent=1 // pred_fallthru
      _
    %v36 = vld [vmem:[#allocation2] sm:$0xff]
    %v37 = vld [vmem:[#allocation2 + $0x8] sm:$0xff]
    %v38 = vld [vmem:[#allocation2 + $0x10] sm:$0xff]
    %v39 = vld [vmem:[#allocation2 + $0x18] sm:$0xff]
    %v40 = vld [vmem:[#allocation2 + $0x20] sm:$0xff]
    %v41 = vld [vmem:[#allocation2 + $0x28] sm:$0xff]
    %v42 = vld [vmem:[#allocation2 + $0x30] sm:$0xff]
    %v43 = vld [vmem:[#allocation2 + $0x38] sm:$0xff]
    %v44 = vld [vmem:[#allocation5] sm:$0xff]
    %v45 = vld [vmem:[#allocation5 + $0x8] sm:$0xff]
    %v46 = vld [vmem:[#allocation5 + $0x10] sm:$0xff]
    %v47 = vld [vmem:[#allocation5 + $0x18] sm:$0xff]
    %v48 = vld [vmem:[#allocation5 + $0x20] sm:$0xff]
    %v49 = vld [vmem:[#allocation5 + $0x28] sm:$0xff]
    %v50 = vld [vmem:[#allocation5 + $0x30] sm:$0xff]
    %v51 = vld [vmem:[#allocation5 + $0x38] sm:$0xff]
    %v52 = vmul.f32 %v44, 2.0
    %v53 = vmul.f32 %v45, 2.0
    %v54 = vmul.f32 %v46, 2.0
    %v55 = vmul.f32 %v47, 2.0
    %v56 = vmul.f32 %v48, 2.0
    %v57 = vmul.f32 %v49, 2.0
    %v58 = vmul.f32 %v50, 2.0
    %v59 = vmul.f32 %v51, 2.0
    %v60 = vadd.f32 %v36, %v52
    %v61 = vadd.f32 %v37, %v53
    %v62 = vadd.f32 %v38, %v54
    %v63 = vadd.f32 %v39, %v55
    %v64 = vadd.f32 %v40, %v56
    %v65 = vadd.f32 %v41, %v57
    %v66 = vadd.f32 %v42, %v58
    %v67 = vadd.f32 %v43, %v59
    %v68 = vadd.f32 %v60, 0.5
    %v69 = vadd.f32 %v61, 0.5
    %v70 = vadd.f32 %v62, 0.5
    %v71 = vadd.f32 %v63, 0.5
    %v72 = vadd.f32 %v64, 0.5
    %v73 = vadd.f32 %v65, 0.5
    %v74 = vadd.f32 %v66, 0.5
    %v75 = vadd.f32 %v67, 0.5
    %76 = vst [vmem:[#allocation7] sm:$0xff] %v68
    %77 = vst [vmem:[#allocation7 + $0x8] sm:$0xff] %v69
    %78 = vst [vmem:[#allocation7 + $0x10] sm:$0xff] %v70
    %79 = vst [vmem:[#allocation7 + $0x18] sm:$0xff] %v71
    %80 = vst [vmem:[#allocation7 + $0x20] sm:$0xff] %v72
    %81 = vst [vmem:[#allocation7 + $0x28] sm:$0xff] %v73
    %82 = vst [vmem:[#allocation7 + $0x30] sm:$0xff] %v74
    %83 = vst [vmem:[#allocation7 + $0x38] sm:$0xff] %v75
    // Predicated region
    $region18: #{tpu_custom_call.1} parent=1 // pred_check
      _
    $region19: #{tpu_custom_call.1} parent=1 // pred_check_branch
      %85 = sbr.rel (0) target = $region21
    $region20: #{tpu_custom_call.1} parent=1 // pred_region
      %s87 = ssub.s32 1024, 1024
      %88 = vsyncadd [#allocation4], %s87
      %s90 = sshll.u32 [#allocation7], 4
      %s91 = int_to_ptr.vmem [resolvable:$true] %s90
      %93 = dma.vmem_to_hbm [thread:$0]  %s91, 1024, %s2, [#allocation4]
    $region21: #{tpu_custom_call.1} parent=1 // pred_fallthru
      _
    // Predicated region
    $region22: #{tpu_custom_call.1} parent=1 // pred_check
      _
    $region23: #{tpu_custom_call.1} parent=1 // pred_check_branch
      %95 = sbr.rel (0) target = $region25
    $region24: #{tpu_custom_call.1} parent=1 // pred_region
      %96 = dma.done [#allocation4], 1024
    $region25: #{tpu_custom_call.1} parent=1 // pred_fallthru
      _
    %97 = vsyncpa [#allocation3], 1
    %98 = vsyncpa [#allocation6], 1
    %99 = vsyncpa [#allocation4], 1

</llo_original>
